<compile_context>
chip_gen: v7x
topology: tpu7x:2x2x1
jax: 0.10.0
libtpu: 0.0.40
codegen_flags: <defaults>
</compile_context>

<pallas_src>
import functools

import jax
import jax.numpy as jnp
from jax.experimental import pallas as pl
from jax.experimental.pallas import tpu as pltpu


def _round_up(x, m):
    return (x + m - 1) // m * m


def _default_tile_n(c_out):
    # lane-dense output tile (multiple of 128), capped at 256
    return min(_round_up(c_out, 128), 256)


def _default_tile_k(c_in):
    # lane-dense K tile (multiple of 128), capped at 512
    return min(_round_up(c_in, 128), 512)


def _default_tile_m(batch, compute_dtype):
    # sublane packing: 16 rows for bf16 inputs, 8 for f32
    sub = 16 if jnp.dtype(compute_dtype) == jnp.dtype(jnp.bfloat16) else 8
    return min(_round_up(batch, sub), 256)


def _apply_act(y, activation, relu):
    if activation:
        y = jnp.maximum(y, 0.0) if relu else jax.nn.sigmoid(y)
    return y


def _mlp_kernel_single_k(x_ref, wt_ref, b_ref, o_ref, *, activation, relu):
    # Whole contraction in one tile: no scratch, no accumulator round-trip.
    # x_ref: (tm, K) ; wt_ref: (K, tn) ; b_ref: (1, tn) f32 ; o_ref: (tm, tn)
    y = jnp.dot(x_ref[...], wt_ref[...], preferred_element_type=jnp.float32)
    y = y + b_ref[...]                      # f32 bias add, broadcast over rows
    o_ref[...] = _apply_act(y, activation, relu).astype(o_ref.dtype)


def _mlp_kernel_multi_k(x_ref, wt_ref, b_ref, o_ref, acc_ref, *, activation, relu):
    # x_ref:   (tm, tk)  compute dtype (bf16 or f32)
    # wt_ref:  (tk, tn)  compute dtype (W^T tile)
    # b_ref:   (1,  tn)  f32 bias tile
    # o_ref:   (tm, tn)  output tile
    # acc_ref: (tm, tn)  f32 accumulator scratch, resident across the K axis
    k = pl.program_id(2)

    @pl.when(k == 0)
    def _():
        # Fold bias into the accumulator init (saves an epilogue add pass).
        acc_ref[...] = jnp.broadcast_to(b_ref[...], acc_ref.shape)

    acc_ref[...] += jnp.dot(x_ref[...], wt_ref[...],
                            preferred_element_type=jnp.float32)

    @pl.when(k == pl.num_programs(2) - 1)
    def _():
        o_ref[...] = _apply_act(acc_ref[...], activation, relu).astype(o_ref.dtype)


def mlp_prepare_params(weight, bias, *, compute_dtype=jnp.bfloat16,
                       tile_n=None, tile_k=None):
    """One-time weight prep (do this at load time, not per forward call).

    weight: (C_out, C_in)  PyTorch nn.Linear layout.
    bias:   (C_out,)
    Returns: wt  (Cin_p, Cout_p) transposed + zero-padded, cast to compute_dtype
             b2d (1, Cout_p)     zero-padded float32 bias
    """
    C_out, C_in = weight.shape
    tn = tile_n or _default_tile_n(C_out)
    tk = tile_k or _default_tile_k(C_in)
    Cout_p = _round_up(C_out, tn)
    Cin_p = _round_up(C_in, tk)
    wt = jnp.pad(weight.T, ((0, Cin_p - C_in), (0, Cout_p - C_out))
                 ).astype(compute_dtype)
    b2d = jnp.pad(bias.astype(jnp.float32).reshape(1, C_out),
                  ((0, 0), (0, Cout_p - C_out)))
    return wt, b2d


def mlp_forward_prepared(x, wt, b2d, out_features, *, activation=True, relu=True,
                         tile_m=None, tile_n=None, tile_k=None):
    """Forward with prepared params (wt = (Cin_p, Cout_p), b2d = (1, Cout_p))."""
    B, C_in = x.shape
    out_dtype = x.dtype
    compute_dtype = wt.dtype

    tm = tile_m or _default_tile_m(B, compute_dtype)
    tn = tile_n or _default_tile_n(out_features)
    tk = tile_k or _default_tile_k(C_in)

    Cin_p, Cout_p = wt.shape
    assert Cin_p % tk == 0 and Cout_p % tn == 0, "prepared params / tile mismatch"
    Bp = _round_up(B, tm)

    # Pad (zero K-padding keeps the matmul exact) and cast once in the wrapper.
    xp = x
    if Bp != B or Cin_p != C_in:
        xp = jnp.pad(x, ((0, Bp - B), (0, Cin_p - C_in)))
    xp = xp.astype(compute_dtype)

    kt = Cin_p // tk
    flops = 2 * B * C_in * out_features
    transcendentals = B * out_features if (activation and not relu) else 0
    bytes_accessed = (xp.size * xp.dtype.itemsize
                      + wt.size * wt.dtype.itemsize
                      + b2d.size * b2d.dtype.itemsize
                      + Bp * Cout_p * jnp.dtype(out_dtype).itemsize)
    cost = pl.CostEstimate(flops=flops, transcendentals=transcendentals,
                           bytes_accessed=bytes_accessed)

    if kt == 1:
        # Single-K fast path: whole contraction in one tile, 2-D parallel grid.
        kernel = functools.partial(_mlp_kernel_single_k,
                                   activation=activation, relu=relu)
        out_p = pl.pallas_call(
            kernel,
            out_shape=jax.ShapeDtypeStruct((Bp, Cout_p), out_dtype),
            grid_spec=pltpu.PrefetchScalarGridSpec(
                num_scalar_prefetch=0,
                grid=(Bp // tm, Cout_p // tn),
                in_specs=[
                    pl.BlockSpec((tm, Cin_p), lambda i, j: (i, 0)),   # x tile
                    pl.BlockSpec((Cin_p, tn), lambda i, j: (0, j)),   # W^T tile
                    pl.BlockSpec((1, tn), lambda i, j: (0, j)),       # bias tile
                ],
                out_specs=pl.BlockSpec((tm, tn), lambda i, j: (i, j)),
            ),
            compiler_params=pltpu.CompilerParams(
                dimension_semantics=("parallel", "parallel"),
            ),
            cost_estimate=cost,
        )(xp, wt, b2d)
    else:
        # Multi-K path: f32 accumulator scratch resident across the K axis.
        kernel = functools.partial(_mlp_kernel_multi_k,
                                   activation=activation, relu=relu)
        out_p = pl.pallas_call(
            kernel,
            out_shape=jax.ShapeDtypeStruct((Bp, Cout_p), out_dtype),
            grid_spec=pltpu.PrefetchScalarGridSpec(
                num_scalar_prefetch=0,
                grid=(Bp // tm, Cout_p // tn, kt),
                in_specs=[
                    pl.BlockSpec((tm, tk), lambda i, j, k: (i, k)),   # x tile
                    pl.BlockSpec((tk, tn), lambda i, j, k: (k, j)),   # W^T tile
                    pl.BlockSpec((1, tn), lambda i, j, k: (0, j)),    # bias tile
                ],
                out_specs=pl.BlockSpec((tm, tn), lambda i, j, k: (i, j)),
                scratch_shapes=[pltpu.VMEM((tm, tn), jnp.float32)],
            ),
            compiler_params=pltpu.CompilerParams(
                dimension_semantics=("parallel", "parallel", "arbitrary"),
            ),
            cost_estimate=cost,
        )(xp, wt, b2d)

    return out_p[:B, :out_features]


def mlp_forward(x, weight, bias, *, activation=True, relu=True,
                compute_dtype=jnp.bfloat16,
                tile_m=None, tile_n=None, tile_k=None):
    """Convenience wrapper: PyTorch-layout weight (C_out, C_in); preps inline."""
    wt, b2d = mlp_prepare_params(weight, bias, compute_dtype=compute_dtype,
                                 tile_n=tile_n, tile_k=tile_k)
    return mlp_forward_prepared(x, wt, b2d, weight.shape[0],
                                activation=activation, relu=relu,
                                tile_m=tile_m, tile_n=tile_n, tile_k=tile_k)


def _ref_mlp(x, weight, bias, *, activation=True, relu=True):
    y = x @ weight.T + bias
    if activation:
        y = jnp.maximum(y, 0.0) if relu else jax.nn.sigmoid(y)
    return y


if __name__ == "__main__":
    key = jax.random.PRNGKey(0)
    k_x, k_w, k_b, k_x2, k_w2, k_b2 = jax.random.split(key, 6)

    # ---- small shapes matching the module (MLP(32, 16), batch 8) ----
    B, C_in, C_out = 8, 32, 16
    x = jax.random.normal(k_x, (B, C_in), dtype=jnp.float32)
    bound = 1.0 / jnp.sqrt(jnp.float32(C_in))   # PyTorch default Linear init range
    weight = jax.random.uniform(k_w, (C_out, C_in), minval=-bound, maxval=bound,
                                dtype=jnp.float32)
    bias = jax.random.uniform(k_b, (C_out,), minval=-bound, maxval=bound,
                              dtype=jnp.float32)

    # One-time prep (transpose / pad / cast done once, reused across calls).
    # f32 compute path: bit-for-bit comparable to the reference.
    wt32, b32 = mlp_prepare_params(weight, bias, compute_dtype=jnp.float32)
    for act, relu in ((True, True), (True, False), (False, True)):
        out = jax.block_until_ready(
            mlp_forward_prepared(x, wt32, b32, C_out, activation=act, relu=relu))
        ref = _ref_mlp(x, weight, bias, activation=act, relu=relu)
        assert out.shape == (B, C_out)
        assert jnp.allclose(out, ref, atol=1e-5, rtol=1e-5), (act, relu)

    # bf16 compute path (default, HBM/MXU-friendly): loose tolerance vs f32 ref.
    wt16, b16 = mlp_prepare_params(weight, bias, compute_dtype=jnp.bfloat16)
    out_bf = jax.block_until_ready(
        mlp_forward_prepared(x, wt16, b16, C_out, activation=True, relu=True))
    ref = _ref_mlp(x, weight, bias, activation=True, relu=True)
    assert jnp.allclose(out_bf, ref, atol=2e-2, rtol=2e-2)

    # ---- non-aligned shapes forcing the multi-K accumulator path ----
    B2, Cin2, Cout2 = 300, 600, 300
    x2 = jax.random.normal(k_x2, (B2, Cin2), dtype=jnp.float32)
    bound2 = 1.0 / jnp.sqrt(jnp.float32(Cin2))
    w2 = jax.random.uniform(k_w2, (Cout2, Cin2), minval=-bound2, maxval=bound2,
                            dtype=jnp.float32)
    b2 = jax.random.uniform(k_b2, (Cout2,), minval=-bound2, maxval=bound2,
                            dtype=jnp.float32)
    out2 = jax.block_until_ready(
        mlp_forward(x2, w2, b2, activation=True, relu=False,
                    compute_dtype=jnp.bfloat16,
                    tile_m=128, tile_n=128, tile_k=128))   # grid = (3, 3, 5)
    ref2 = _ref_mlp(x2, w2, b2, activation=True, relu=False)
    assert out2.shape == (B2, Cout2)
    assert jnp.allclose(out2, ref2, atol=2e-2, rtol=2e-2)

    print("KERNEL_OK")
</pallas_src>

<mosaic_0001>
module attributes {stable_mosaic.version = 11 : i64} {
  func.func @_mlp_kernel_single_k(%arg0: i32, %arg1: i32, %arg2: memref<8x128xf32, #tpu.memory_space<vmem>>, %arg3: memref<128x128xf32, #tpu.memory_space<vmem>>, %arg4: memref<1x128xf32, #tpu.memory_space<vmem>>, %arg5: memref<8x128xf32, #tpu.memory_space<vmem>>) attributes {dimension_semantics = [#tpu.dimension_semantics<parallel>, #tpu.dimension_semantics<parallel>], iteration_bounds = array<i64: 1, 1>, scalar_prefetch = 0 : i64, scratch_operands = 0 : i64, tpu.core_type = #tpu.core_type<tc>, window_params = [{transform_indices = @transform_0, window_bounds = array<i64: 8, 128>}, {transform_indices = @transform_1, window_bounds = array<i64: 128, 128>}, {transform_indices = @transform_2, window_bounds = array<i64: 1, 128>}, {transform_indices = @transform_3, window_bounds = array<i64: 8, 128>}]} {
    %c0 = arith.constant 0 : index
    %c0_0 = arith.constant 0 : index
    %0 = vector.load %arg2[%c0, %c0_0] : memref<8x128xf32, #tpu.memory_space<vmem>>, vector<8x128xf32>
    %c0_1 = arith.constant 0 : index
    %c0_2 = arith.constant 0 : index
    %1 = vector.load %arg3[%c0_1, %c0_2] : memref<128x128xf32, #tpu.memory_space<vmem>>, vector<128x128xf32>
    %cst = arith.constant dense<0.000000e+00> : vector<8x128xf32>
    %2 = tpu.matmul %0, %1, %cst {dimension_numbers = #tpu.dot_dimension_numbers<[1], [0], [0], [1], [0, 0, 1, 1], [], []>} : vector<8x128xf32>, vector<128x128xf32>, vector<8x128xf32> -> vector<8x128xf32>
    %c0_3 = arith.constant 0 : index
    %c0_4 = arith.constant 0 : index
    %3 = vector.load %arg4[%c0_3, %c0_4] : memref<1x128xf32, #tpu.memory_space<vmem>>, vector<1x128xf32>
    %4 = vector.broadcast %3 : vector<1x128xf32> to vector<8x128xf32>
    %5 = arith.addf %2, %4 : vector<8x128xf32>
    %cst_5 = arith.constant 0.000000e+00 : f32
    %6 = vector.broadcast %cst_5 : f32 to vector<8x128xf32>
    %7 = arith.maximumf %5, %6 : vector<8x128xf32>
    %c0_6 = arith.constant 0 : index
    %c0_7 = arith.constant 0 : index
    %8 = vector.load %arg5[%c0_6, %c0_7] : memref<8x128xf32, #tpu.memory_space<vmem>>, vector<8x128xf32>
    tpu.vector_store %arg5[%c0_6, %c0_7], %7 {strides = array<i32>} : memref<8x128xf32, #tpu.memory_space<vmem>>, vector<8x128xf32>,
    return
  }
  func.func @transform_0(%arg0: i32, %arg1: i32) -> (i32, i32) {
    %c0_i32 = arith.constant 0 : i32
    %c0_i32_0 = arith.constant 0 : i32
    return %arg0, %c0_i32 : i32, i32
  }
  func.func @transform_1(%arg0: i32, %arg1: i32) -> (i32, i32) {
    %c0_i32 = arith.constant 0 : i32
    %c0_i32_0 = arith.constant 0 : i32
    return %c0_i32, %arg1 : i32, i32
  }
  func.func @transform_2(%arg0: i32, %arg1: i32) -> (i32, i32) {
    %c0_i32 = arith.constant 0 : i32
    %c0_i32_0 = arith.constant 0 : i32
    return %c0_i32, %arg1 : i32, i32
  }
  func.func @transform_3(%arg0: i32, %arg1: i32) -> (i32, i32) {
    %c0_i32 = arith.constant 0 : i32
    return %arg0, %arg1 : i32, i32
  }
}

</mosaic_0001>

<llo_original>
// kernel: tpu_custom_call.1
$region0: #{tpu_custom_call.1}
  #allocation0 [shape = 'u32[]', space=smem, size = 0x4, offset = 0x4, fixed_abs, tag = 'smem constant byte address 0x4 - core index']
  #allocation1 [shape = 'u32[144,128]{1,0:T(1,128)}', space=vmem, size = 0x12000, scoped, tag = 'internal scratch']
  %s0 = inlined_call_operand.hbm [shape: f32[8,128], index: 0, kind: input, shape index: {}]
  %s1 = inlined_call_operand.hbm [shape: f32[128,128], index: 1, kind: input, shape index: {}]
  %s2 = inlined_call_operand.vmem [shape: f32[1,128], index: 2, kind: input, shape index: {}]
  %s3 = inlined_call_operand.hbm [shape: f32[8,128], index: 3, kind: output, shape index: {}]
  %s4 = sld [smem:[#allocation0]]
  $region30: #{tpu_custom_call.1} parent=0
    _
  %s6 = ssub.s32 1, %s4
  %s7 = scalar_select 0, %s6, %s4
  $region1: #{tpu_custom_call.1} parent=0
    #allocation2 [shape = 'u8[4096]{0}', space=vmem, size = 0x1000, scoped, tag = 'input window, operand 0, single buffered']
    #allocation3 [shape = 's32[1]{0}', space=sflag, size = 0x4, scoped, tag = 'scoped memory for tpu_custom_call.1']
    #allocation4 [shape = 's32[1]{0}', space=sflag, size = 0x4, scoped, tag = 'scoped memory for tpu_custom_call.1']
    #allocation5 [shape = 'u8[65536]{0}', space=vmem, size = 0x10000, scoped, tag = 'input window, operand 1, single buffered']
    #allocation6 [shape = 's32[1]{0}', space=sflag, size = 0x4, scoped, tag = 'scoped memory for tpu_custom_call.1']
    #allocation7 [shape = 'u8[4096]{0}', space=vmem, size = 0x1000, scoped, tag = 'output window, operand 0, single buffered']
    %8 = vsyncpa [#allocation3], 0
    %9 = vsyncpa [#allocation6], 0
    %10 = vsyncpa [#allocation4], 0
    // Predicated region
    $region2: #{tpu_custom_call.1} parent=1 // pred_check
      _
    $region3: #{tpu_custom_call.1} parent=1 // pred_check_branch
      %12 = sbr.rel (0) target = $region5
    $region4: #{tpu_custom_call.1} parent=1 // pred_region
      %s14 = ssub.s32 128, 128
      %15 = vsyncadd [#allocation3], %s14
      %s17 = sshll.u32 [#allocation2], 4
      %s18 = int_to_ptr.vmem [resolvable:$true] %s17
      %20 = dma.hbm_to_vmem [thread:$0]  %s0, 128, %s18, [#allocation3]
    $region5: #{tpu_custom_call.1} parent=1 // pred_fallthru
      _
    // Predicated region
    $region6: #{tpu_custom_call.1} parent=1 // pred_check
      _
    $region7: #{tpu_custom_call.1} parent=1 // pred_check_branch
      %22 = sbr.rel (0) target = $region9
    $region8: #{tpu_custom_call.1} parent=1 // pred_region
      %s24 = ssub.s32 2048, 2048
      %25 = vsyncadd [#allocation6], %s24
      %s26 = sshll.u32 [#allocation5], 4
      %s27 = int_to_ptr.vmem [resolvable:$true] %s26
      %32 = dma.hbm_to_vmem [thread:$0]  %s1, 2048, %s27, [#allocation6], 128, 128, 8
    $region9: #{tpu_custom_call.1} parent=1 // pred_fallthru
      _
    // Predicated region
    $region10: #{tpu_custom_call.1} parent=1 // pred_check
      _
    $region11: #{tpu_custom_call.1} parent=1 // pred_check_branch
      %34 = sbr.rel (0) target = $region13
    $region12: #{tpu_custom_call.1} parent=1 // pred_region
      _
    $region13: #{tpu_custom_call.1} parent=1 // pred_fallthru
      _
    // Predicated region
    $region14: #{tpu_custom_call.1} parent=1 // pred_check
      _
    $region15: #{tpu_custom_call.1} parent=1 // pred_check_branch
      %36 = sbr.rel (0) target = $region17
    $region16: #{tpu_custom_call.1} parent=1 // pred_region
      %37 = dma.done [#allocation3], 128
    $region17: #{tpu_custom_call.1} parent=1 // pred_fallthru
      _
    // Predicated region
    $region18: #{tpu_custom_call.1} parent=1 // pred_check
      _
    $region19: #{tpu_custom_call.1} parent=1 // pred_check_branch
      %39 = sbr.rel (0) target = $region21
    $region20: #{tpu_custom_call.1} parent=1 // pred_region
      %40 = dma.done [#allocation6], 2048
    $region21: #{tpu_custom_call.1} parent=1 // pred_fallthru
      _
    %v41 = vld [vmem:[#allocation2] sm:$0xff]
    %v42 = vld [vmem:[#allocation5] sm:$0xff]
    %v43 = vld [vmem:[#allocation5 + $0x8] sm:$0xff]
    %v44 = vld [vmem:[#allocation5 + $0x10] sm:$0xff]
    %v45 = vld [vmem:[#allocation5 + $0x18] sm:$0xff]
    %v46 = vld [vmem:[#allocation5 + $0x20] sm:$0xff]
    %v47 = vld [vmem:[#allocation5 + $0x28] sm:$0xff]
    %v48 = vld [vmem:[#allocation5 + $0x30] sm:$0xff]
    %v49 = vld [vmem:[#allocation5 + $0x38] sm:$0xff]
    %v50 = vld [vmem:[#allocation5 + $0x40] sm:$0xff]
    %v51 = vld [vmem:[#allocation5 + $0x48] sm:$0xff]
    %v52 = vld [vmem:[#allocation5 + $0x50] sm:$0xff]
    %v53 = vld [vmem:[#allocation5 + $0x58] sm:$0xff]
    %v54 = vld [vmem:[#allocation5 + $0x60] sm:$0xff]
    %v55 = vld [vmem:[#allocation5 + $0x68] sm:$0xff]
    %v56 = vld [vmem:[#allocation5 + $0x70] sm:$0xff]
    %v57 = vld [vmem:[#allocation5 + $0x78] sm:$0xff]
    %v58 = vld [vmem:[%s2] sm:$0x1]
    %v60 = vlaneseq
    %v61 = vshrl.u32 %v60, 7
    %v62 = vsub.s32 0, %v61
    %v63 = vrot.slane %v58, %v62
    %65 = vmatprep.subr.mxu0 0.0
    %66 = vmatpush1.msra.mxu0 %v42
    %67 = vmatprep.subr.mxu0 0.0
    %68 = vmatpush1.msra.mxu0 %v43
    %69 = vmatprep.subr.mxu0 0.0
    %70 = vmatpush1.msra.mxu0 %v44
    %71 = vmatprep.subr.mxu0 0.0
    %72 = vmatpush1.msra.mxu0 %v45
    %73 = vmatprep.subr.mxu0 0.0
    %74 = vmatpush1.msra.mxu0 %v46
    %75 = vmatprep.subr.mxu0 0.0
    %76 = vmatpush1.msra.mxu0 %v47
    %77 = vmatprep.subr.mxu0 0.0
    %78 = vmatpush1.msra.mxu0 %v48
    %79 = vmatprep.subr.mxu0 0.0
    %80 = vmatpush1.msra.mxu0 %v49
    %81 = vmatprep.subr.mxu0 0.0
    %82 = vmatpush1.msra.mxu0 %v50
    %83 = vmatprep.subr.mxu0 0.0
    %84 = vmatpush1.msra.mxu0 %v51
    %85 = vmatprep.subr.mxu0 0.0
    %86 = vmatpush1.msra.mxu0 %v52
    %87 = vmatprep.subr.mxu0 0.0
    %88 = vmatpush1.msra.mxu0 %v53
    %89 = vmatprep.subr.mxu0 0.0
    %90 = vmatpush1.msra.mxu0 %v54
    %91 = vmatprep.subr.mxu0 0.0
    %92 = vmatpush1.msra.mxu0 %v55
    %93 = vmatprep.subr.mxu0 0.0
    %94 = vmatpush1.msra.mxu0 %v56
    %95 = vmatprep.subr.mxu0 0.0
    %96 = vmatpush1.msra.mxu0 %v57
    %97 = vmatprep.subr.mxu0 0.0
    %98 = vmatpush1.msra.mxu0 0.0
    %99 = vmatprep.subr.mxu0 0.0
    %100 = vmatpush1.msra.mxu0 0.0
    %101 = vmatprep.subr.mxu0 0.0
    %102 = vmatpush1.msra.mxu0 0.0
    %103 = vmatprep.subr.mxu0 0.0
    %104 = vmatpush1.msra.mxu0 0.0
    %105 = vmatprep.subr.mxu0 0.0
    %106 = vmatpush1.msra.mxu0 0.0
    %107 = vmatprep.subr.mxu0 0.0
    %108 = vmatpush1.msra.mxu0 0.0
    %109 = vmatprep.subr.mxu0 0.0
    %110 = vmatpush1.msra.mxu0 0.0
    %111 = vmatprep.subr.mxu0 0.0
    %112 = vmatpush1.msra.mxu0 0.0
    %113 = vmatprep.subr.mxu0 0.0
    %114 = vmatpush1.msra.mxu0 0.0
    %115 = vmatprep.subr.mxu0 0.0
    %116 = vmatpush1.msra.mxu0 0.0
    %117 = vmatprep.subr.mxu0 0.0
    %118 = vmatpush1.msra.mxu0 0.0
    %119 = vmatprep.subr.mxu0 0.0
    %120 = vmatpush1.msra.mxu0 0.0
    %121 = vmatprep.subr.mxu0 0.0
    %122 = vmatpush1.msra.mxu0 0.0
    %123 = vmatprep.subr.mxu0 0.0
    %124 = vmatpush1.msra.mxu0 0.0
    %125 = vmatprep.subr.mxu0 0.0
    %126 = vmatpush1.msra.mxu0 0.0
    %127 = vmatprep.subr.mxu0 0.0
    %128 = vmatpush1.msra.mxu0 0.0
    %129 = vmatprep.mubr.f32.mxu0 0.0
    %130 = vmatmul.mubr.f32.gmra.mrb[0].mxu0 %v41
    %v131 = vpop.f32.mrb[0].mxu0
    %v132 = vadd.f32 %v63, %v131
    %v133 = vpop.f32.mrb[0].mxu0
    %134 = vdwg.mxu0
    %v135 = vmax.f32 %v132, 0.0
    %136 = vst [vmem:[#allocation7] sm:$0xff] %v135
    // Predicated region
    $region22: #{tpu_custom_call.1} parent=1 // pred_check
      _
    $region23: #{tpu_custom_call.1} parent=1 // pred_check_branch
      %138 = sbr.rel (0) target = $region25
    $region24: #{tpu_custom_call.1} parent=1 // pred_region
      %s140 = ssub.s32 128, 128
      %141 = vsyncadd [#allocation4], %s140
      %s143 = sshll.u32 [#allocation7], 4
      %s144 = int_to_ptr.vmem [resolvable:$true] %s143
      %146 = dma.vmem_to_hbm [thread:$0]  %s144, 128, %s3, [#allocation4]
    $region25: #{tpu_custom_call.1} parent=1 // pred_fallthru
      _
    // Predicated region
    $region26: #{tpu_custom_call.1} parent=1 // pred_check
      _
    $region27: #{tpu_custom_call.1} parent=1 // pred_check_branch
      %148 = sbr.rel (0) target = $region29
    $region28: #{tpu_custom_call.1} parent=1 // pred_region
      %149 = dma.done [#allocation4], 128
    $region29: #{tpu_custom_call.1} parent=1 // pred_fallthru
      _
    %150 = vsyncpa [#allocation3], 1
    %151 = vsyncpa [#allocation6], 1
    %152 = vsyncpa [#allocation4], 1

</llo_original>
